<compile_context>
chip_gen: v7x
topology: tpu7x:2x2x1
jax: 0.10.0
libtpu: 0.0.40
codegen_flags: <defaults>
</compile_context>

<pallas_src>
import functools

import jax
import jax.numpy as jnp
from jax.experimental import pallas as pl
from jax.experimental.pallas import tpu as pltpu


def rnn_cell_kernel(x_ref, h_ref, wx_ref, wh_ref, b_ref, out_ref, *,
                    hidden_size, output_size):
    # bf16 MXU operands, f32 accumulation.
    x = x_ref[...].astype(jnp.bfloat16)                       # [Bp, I]
    h = h_ref[...].astype(jnp.bfloat16)                       # [Bp, H]

    # Fused linear: x @ Wx + h @ Wh == concat(x, h) @ W_cat   -> [Bp, Npad] (lane-dense)
    res = jnp.dot(x, wx_ref[...], preferred_element_type=jnp.float32)
    res = res + jnp.dot(h, wh_ref[...], preferred_element_type=jnp.float32)
    res = res + b_ref[...]                                    # [1, Npad] broadcast, f32

    # Numerically-stable log-softmax restricted to the logit columns [H, H+O).
    col = jax.lax.broadcasted_iota(jnp.int32, res.shape, 1)
    is_logit = (col >= hidden_size) & (col < hidden_size + output_size)
    masked = jnp.where(is_logit, res, -jnp.inf)
    m = jnp.max(masked, axis=1, keepdims=True)
    lse = jnp.log(jnp.sum(jnp.exp(masked - m), axis=1, keepdims=True)) + m

    # Hidden columns pass through untouched; logit columns get log-softmax; pad columns are 0.
    out_ref[...] = (res - jnp.where(is_logit, lse, jnp.float32(0.0))).astype(out_ref.dtype)


def _round_up(n, m):
    return ((n + m - 1) // m) * m


def prepare_params(w_i2h, b_i2h, w_i2o, b_i2o, input_size):
    """One-time parameter fusion/padding.

    w_* are stored pre-transposed as [fan_in, out_features] (PyTorch weight.T).
    Returns Wx [I, Npad] bf16, Wh [H_in, Npad] bf16, b_cat [1, Npad] f32.
    """
    H = w_i2h.shape[1]
    O = w_i2o.shape[1]
    n = H + O
    n_pad = max(128, _round_up(n, 128))

    w_cat = jnp.concatenate([w_i2h, w_i2o], axis=1)                    # [fan_in, H+O]
    w_cat = jnp.pad(w_cat, ((0, 0), (0, n_pad - n)))
    b_cat = jnp.concatenate([b_i2h.reshape(1, -1), b_i2o.reshape(1, -1)], axis=1)
    b_cat = jnp.pad(b_cat, ((0, 0), (0, n_pad - n))).astype(jnp.float32)

    wx = w_cat[:input_size].astype(jnp.bfloat16)                       # rows for x
    wh = w_cat[input_size:].astype(jnp.bfloat16)                       # rows for h
    return wx, wh, b_cat


def rnn_forward(x, h, wx, wh, b_cat, *, hidden_size, output_size):
    """x: [B, I] f32, h: [B, H] f32. Returns (log_probs [B, O], new_hidden [B, H])."""
    B = x.shape[0]
    b_pad = max(8, _round_up(B, 8))          # sublane granularity -> unmasked store
    if b_pad != B:
        x = jnp.pad(x, ((0, b_pad - B), (0, 0)))
        h = jnp.pad(h, ((0, b_pad - B), (0, 0)))
    n_pad = wx.shape[1]

    vmem = pl.BlockSpec(memory_space=pltpu.MemorySpace.VMEM)
    slab = pl.pallas_call(
        functools.partial(rnn_cell_kernel,
                          hidden_size=hidden_size, output_size=output_size),
        out_shape=jax.ShapeDtypeStruct((b_pad, n_pad), jnp.float32),
        in_specs=[vmem, vmem, vmem, vmem, vmem],
        out_specs=vmem,
    )(x, h, wx, wh, b_cat)

    hidden = slab[:B, :hidden_size]
    output = slab[:B, hidden_size:hidden_size + output_size]
    return output, hidden


if __name__ == "__main__":
    # Small shapes consistent with the module's forward.
    B = 2
    input_size = 16
    hidden_size = 32
    output_size = 8

    key = jax.random.PRNGKey(0)
    k_x, k_h, k_w1, k_b1, k_w2, k_b2 = jax.random.split(key, 6)

    # Deterministic parameter init, mimicking nn.Linear's U(-1/sqrt(fan_in), +).
    fan_in = input_size + hidden_size
    bound = 1.0 / jnp.sqrt(jnp.float32(fan_in))
    # Stored as [in_features, out_features] (i.e. PyTorch weight transposed).
    w_i2h = jax.random.uniform(k_w1, (fan_in, hidden_size), jnp.float32, -bound, bound)
    b_i2h = jax.random.uniform(k_b1, (1, hidden_size), jnp.float32, -bound, bound)
    w_i2o = jax.random.uniform(k_w2, (fan_in, output_size), jnp.float32, -bound, bound)
    b_i2o = jax.random.uniform(k_b2, (1, output_size), jnp.float32, -bound, bound)

    x = jax.random.normal(k_x, (B, input_size), jnp.float32)
    h0 = jnp.zeros((B, hidden_size), jnp.float32)   # like initHidden, batched per row

    # One-time weight fusion/padding (not part of the per-step cost).
    wx, wh, b_cat = prepare_params(w_i2h, b_i2h, w_i2o, b_i2o, input_size)

    out, h1 = rnn_forward(x, h0, wx, wh, b_cat,
                          hidden_size=hidden_size, output_size=output_size)
    jax.block_until_ready((out, h1))

    # Reference in plain JAX with the same bf16-operand / f32-accumulate math.
    xb = x.astype(jnp.bfloat16)
    hb = h0.astype(jnp.bfloat16)
    wxh = w_i2h[:input_size].astype(jnp.bfloat16)
    whh = w_i2h[input_size:].astype(jnp.bfloat16)
    wxo = w_i2o[:input_size].astype(jnp.bfloat16)
    who = w_i2o[input_size:].astype(jnp.bfloat16)
    ref_hid = (jnp.dot(xb, wxh, preferred_element_type=jnp.float32)
               + jnp.dot(hb, whh, preferred_element_type=jnp.float32) + b_i2h)
    ref_logits = (jnp.dot(xb, wxo, preferred_element_type=jnp.float32)
                  + jnp.dot(hb, who, preferred_element_type=jnp.float32) + b_i2o)
    ref_out = ref_logits - jax.scipy.special.logsumexp(ref_logits, axis=1, keepdims=True)

    assert out.shape == (B, output_size) and h1.shape == (B, hidden_size)
    assert jnp.allclose(out, ref_out, atol=2e-3), "log-softmax output mismatch"
    assert jnp.allclose(h1, ref_hid, atol=2e-3), "hidden output mismatch"

    print("KERNEL_OK")
</pallas_src>

<mosaic_0001>
module attributes {stable_mosaic.version = 11 : i64} {
  func.func @rnn_cell_kernel(%arg0: memref<8x16xf32, #tpu.memory_space<vmem>>, %arg1: memref<8x32xf32, #tpu.memory_space<vmem>>, %arg2: memref<16x128xbf16, #tpu.memory_space<vmem>>, %arg3: memref<32x128xbf16, #tpu.memory_space<vmem>>, %arg4: memref<1x128xf32, #tpu.memory_space<vmem>>, %arg5: memref<8x128xf32, #tpu.memory_space<vmem>>) attributes {dimension_semantics = [], scalar_prefetch = 0 : i64, scratch_operands = 0 : i64, tpu.core_type = #tpu.core_type<tc>} {
    %c0 = arith.constant 0 : index
    %c0_0 = arith.constant 0 : index
    %0 = vector.load %arg0[%c0, %c0_0] : memref<8x16xf32, #tpu.memory_space<vmem>>, vector<8x16xf32>
    %1 = arith.truncf %0 : vector<8x16xf32> to vector<8x16xbf16>
    %c0_1 = arith.constant 0 : index
    %c0_2 = arith.constant 0 : index
    %2 = vector.load %arg1[%c0_1, %c0_2] : memref<8x32xf32, #tpu.memory_space<vmem>>, vector<8x32xf32>
    %3 = arith.truncf %2 : vector<8x32xf32> to vector<8x32xbf16>
    %c0_3 = arith.constant 0 : index
    %c0_4 = arith.constant 0 : index
    %4 = vector.load %arg2[%c0_3, %c0_4] : memref<16x128xbf16, #tpu.memory_space<vmem>>, vector<16x128xbf16>
    %cst = arith.constant dense<0.000000e+00> : vector<8x128xf32>
    %5 = tpu.matmul %1, %4, %cst {dimension_numbers = #tpu.dot_dimension_numbers<[1], [0], [0], [1], [0, 0, 1, 1], [], []>} : vector<8x16xbf16>, vector<16x128xbf16>, vector<8x128xf32> -> vector<8x128xf32>
    %c0_5 = arith.constant 0 : index
    %c0_6 = arith.constant 0 : index
    %6 = vector.load %arg3[%c0_5, %c0_6] : memref<32x128xbf16, #tpu.memory_space<vmem>>, vector<32x128xbf16>
    %cst_7 = arith.constant dense<0.000000e+00> : vector<8x128xf32>
    %7 = tpu.matmul %3, %6, %cst_7 {dimension_numbers = #tpu.dot_dimension_numbers<[1], [0], [0], [1], [0, 0, 1, 1], [], []>} : vector<8x32xbf16>, vector<32x128xbf16>, vector<8x128xf32> -> vector<8x128xf32>
    %8 = arith.addf %5, %7 : vector<8x128xf32>
    %c0_8 = arith.constant 0 : index
    %c0_9 = arith.constant 0 : index
    %9 = vector.load %arg4[%c0_8, %c0_9] : memref<1x128xf32, #tpu.memory_space<vmem>>, vector<1x128xf32>
    %10 = vector.broadcast %9 : vector<1x128xf32> to vector<8x128xf32>
    %11 = arith.addf %8, %10 : vector<8x128xf32>
    %12 = tpu.iota {dimensions = array<i32: 1>} : vector<8x128xi32>
    %c32_i32 = arith.constant 32 : i32
    %13 = vector.broadcast %c32_i32 : i32 to vector<8x128xi32>
    %14 = arith.cmpi sge, %12, %13 : vector<8x128xi32>
    %c40_i32 = arith.constant 40 : i32
    %15 = vector.broadcast %c40_i32 : i32 to vector<8x128xi32>
    %16 = arith.cmpi slt, %12, %15 : vector<8x128xi32>
    %17 = arith.andi %14, %16 : vector<8x128xi1>
    %cst_10 = arith.constant 0xFF800000 : f32
    %18 = vector.broadcast %cst_10 : f32 to vector<8x128xf32>
    %19 = arith.select %17, %11, %18 : vector<8x128xi1>, vector<8x128xf32>
    %cst_11 = arith.constant dense<0xFF800000> : vector<8xf32>
    %20 = vector.multi_reduction <maximumf>, %19, %cst_11 [1] : vector<8x128xf32> to vector<8xf32>
    %21 = vector.shape_cast %20 : vector<8xf32> to vector<8x1xf32>
    %22 = vector.broadcast %21 : vector<8x1xf32> to vector<8x128xf32>
    %23 = arith.subf %19, %22 : vector<8x128xf32>
    %24 = math.exp %23 : vector<8x128xf32>
    %cst_12 = arith.constant dense<0.000000e+00> : vector<8xf32>
    %25 = vector.multi_reduction <add>, %24, %cst_12 [1] : vector<8x128xf32> to vector<8xf32>
    %26 = vector.shape_cast %25 : vector<8xf32> to vector<8x1xf32>
    %27 = math.log %26 : vector<8x1xf32>
    %28 = arith.addf %27, %21 : vector<8x1xf32>
    %cst_13 = arith.constant 0.000000e+00 : f32
    %29 = vector.shape_cast %28 : vector<8x1xf32> to vector<8x1xf32>
    %30 = vector.broadcast %29 : vector<8x1xf32> to vector<8x128xf32>
    %31 = vector.broadcast %cst_13 : f32 to vector<8x128xf32>
    %32 = arith.select %17, %30, %31 : vector<8x128xi1>, vector<8x128xf32>
    %33 = arith.subf %11, %32 : vector<8x128xf32>
    %c0_14 = arith.constant 0 : index
    %c0_15 = arith.constant 0 : index
    %34 = vector.load %arg5[%c0_14, %c0_15] : memref<8x128xf32, #tpu.memory_space<vmem>>, vector<8x128xf32>
    tpu.vector_store %arg5[%c0_14, %c0_15], %33 {strides = array<i32>} : memref<8x128xf32, #tpu.memory_space<vmem>>, vector<8x128xf32>,
    return
  }
}

</mosaic_0001>

<llo_original>
// kernel: tpu_custom_call.1
$region0: #{tpu_custom_call.1}
  #allocation0 [shape = 'u32[]', space=smem, size = 0x4, offset = 0x4, fixed_abs, tag = 'smem constant byte address 0x4 - core index']
  #allocation1 [shape = 'u32[144,128]{1,0:T(1,128)}', space=vmem, size = 0x12000, scoped, tag = 'internal scratch']
  %s0 = inlined_call_operand.hbm [shape: f32[8,16], index: 0, kind: input, shape index: {}]
  %s1 = inlined_call_operand.hbm [shape: f32[8,32], index: 1, kind: input, shape index: {}]
  %s2 = inlined_call_operand.hbm [shape: bf16[16,128], index: 2, kind: input, shape index: {}]
  %s3 = inlined_call_operand.hbm [shape: bf16[32,128], index: 3, kind: input, shape index: {}]
  %s4 = inlined_call_operand.vmem [shape: f32[1,128], index: 4, kind: input, shape index: {}]
  %s5 = inlined_call_operand.hbm [shape: f32[8,128], index: 5, kind: output, shape index: {}]
  %s6 = sld [smem:[#allocation0]]
  $region46: #{tpu_custom_call.1} parent=0
    _
  %s8 = ssub.s32 1, %s6
  %s9 = scalar_select 0, %s8, %s6
  $region1: #{tpu_custom_call.1} parent=0
    #allocation2 [shape = 'u8[4096]{0}', space=vmem, size = 0x1000, scoped, tag = 'input window, operand 0, single buffered']
    #allocation3 [shape = 's32[1]{0}', space=sflag, size = 0x4, scoped, tag = 'scoped memory for tpu_custom_call.1']
    #allocation4 [shape = 's32[1]{0}', space=sflag, size = 0x4, scoped, tag = 'scoped memory for tpu_custom_call.1']
    #allocation5 [shape = 'u8[4096]{0}', space=vmem, size = 0x1000, scoped, tag = 'input window, operand 1, single buffered']
    #allocation6 [shape = 's32[1]{0}', space=sflag, size = 0x4, scoped, tag = 'scoped memory for tpu_custom_call.1']
    #allocation7 [shape = 'u8[4096]{0}', space=vmem, size = 0x1000, scoped, tag = 'input window, operand 2, single buffered']
    #allocation8 [shape = 'u8[8192]{0}', space=vmem, size = 0x2000, scoped, tag = 'input window, operand 3, single buffered']
    #allocation9 [shape = 's32[1]{0}', space=sflag, size = 0x4, scoped, tag = 'scoped memory for tpu_custom_call.1']
    #allocation10 [shape = 'u8[4096]{0}', space=vmem, size = 0x1000, scoped, tag = 'output window, operand 0, single buffered']
    %10 = vsyncpa [#allocation3], 0
    %11 = vsyncpa [#allocation6], 0
    %12 = vsyncpa [#allocation9], 0
    %13 = vsyncpa [#allocation4], 0
    // Predicated region
    $region2: #{tpu_custom_call.1} parent=1 // pred_check
      _
    $region3: #{tpu_custom_call.1} parent=1 // pred_check_branch
      %15 = sbr.rel (0) target = $region5
    $region4: #{tpu_custom_call.1} parent=1 // pred_region
      %s17 = ssub.s32 128, 128
      %18 = vsyncadd [#allocation3], %s17
      %s20 = sshll.u32 [#allocation2], 4
      %s21 = int_to_ptr.vmem [resolvable:$true] %s20
      %23 = dma.hbm_to_vmem [thread:$0]  %s0, 128, %s21, [#allocation3]
    $region5: #{tpu_custom_call.1} parent=1 // pred_fallthru
      _
    // Predicated region
    $region6: #{tpu_custom_call.1} parent=1 // pred_check
      _
    $region7: #{tpu_custom_call.1} parent=1 // pred_check_branch
      %25 = sbr.rel (0) target = $region9
    $region8: #{tpu_custom_call.1} parent=1 // pred_region
      %s27 = ssub.s32 128, 128
      %28 = vsyncadd [#allocation6], %s27
      %s30 = sshll.u32 [#allocation5], 4
      %s31 = int_to_ptr.vmem [resolvable:$true] %s30
      %33 = dma.hbm_to_vmem [thread:$0]  %s1, 128, %s31, [#allocation6]
    $region9: #{tpu_custom_call.1} parent=1 // pred_fallthru
      _
    // Predicated region
    $region10: #{tpu_custom_call.1} parent=1 // pred_check
      _
    $region11: #{tpu_custom_call.1} parent=1 // pred_check_branch
      %35 = sbr.rel (0) target = $region13
    $region12: #{tpu_custom_call.1} parent=1 // pred_region
      %s37 = ssub.s32 128, 128
      %38 = vsyncadd [#allocation6], %s37
      %s39 = sshll.u32 [#allocation7], 4
      %s40 = int_to_ptr.vmem [resolvable:$true] %s39
      %45 = dma.hbm_to_vmem [thread:$0]  %s2, 128, %s40, [#allocation6], 64, 64, 4
    $region13: #{tpu_custom_call.1} parent=1 // pred_fallthru
      _
    // Predicated region
    $region14: #{tpu_custom_call.1} parent=1 // pred_check
      _
    $region15: #{tpu_custom_call.1} parent=1 // pred_check_branch
      %47 = sbr.rel (0) target = $region17
    $region16: #{tpu_custom_call.1} parent=1 // pred_region
      %s49 = ssub.s32 256, 256
      %50 = vsyncadd [#allocation9], %s49
      %s51 = sshll.u32 [#allocation8], 4
      %s52 = int_to_ptr.vmem [resolvable:$true] %s51
      %57 = dma.hbm_to_vmem [thread:$0]  %s3, 256, %s52, [#allocation9], 64, 64, 4
    $region17: #{tpu_custom_call.1} parent=1 // pred_fallthru
      _
    // Predicated region
    $region18: #{tpu_custom_call.1} parent=1 // pred_check
      _
    $region19: #{tpu_custom_call.1} parent=1 // pred_check_branch
      %59 = sbr.rel (0) target = $region21
    $region20: #{tpu_custom_call.1} parent=1 // pred_region
      _
    $region21: #{tpu_custom_call.1} parent=1 // pred_fallthru
      _
    // Predicated region
    $region22: #{tpu_custom_call.1} parent=1 // pred_check
      _
    $region23: #{tpu_custom_call.1} parent=1 // pred_check_branch
      %61 = sbr.rel (0) target = $region25
    $region24: #{tpu_custom_call.1} parent=1 // pred_region
      %62 = dma.done [#allocation3], 128
    $region25: #{tpu_custom_call.1} parent=1 // pred_fallthru
      _
    // Predicated region
    $region26: #{tpu_custom_call.1} parent=1 // pred_check
      _
    $region27: #{tpu_custom_call.1} parent=1 // pred_check_branch
      %64 = sbr.rel (0) target = $region29
    $region28: #{tpu_custom_call.1} parent=1 // pred_region
      %65 = dma.done [#allocation6], 128
    $region29: #{tpu_custom_call.1} parent=1 // pred_fallthru
      _
    // Predicated region
    $region30: #{tpu_custom_call.1} parent=1 // pred_check
      _
    $region31: #{tpu_custom_call.1} parent=1 // pred_check_branch
      %67 = sbr.rel (0) target = $region33
    $region32: #{tpu_custom_call.1} parent=1 // pred_region
      %68 = dma.done [#allocation6], 128
    $region33: #{tpu_custom_call.1} parent=1 // pred_fallthru
      _
    // Predicated region
    $region34: #{tpu_custom_call.1} parent=1 // pred_check
      _
    $region35: #{tpu_custom_call.1} parent=1 // pred_check_branch
      %70 = sbr.rel (0) target = $region37
    $region36: #{tpu_custom_call.1} parent=1 // pred_region
      %71 = dma.done [#allocation9], 256
    $region37: #{tpu_custom_call.1} parent=1 // pred_fallthru
      _
    %v73 = vld [vmem:[#allocation2] sm:$0xff]
    %v74 = vpack.c.bf16 %v73, %v73
    %v75 = vld [vmem:[#allocation5] sm:$0xff]
    %v76 = vpack.c.bf16 %v75, %v75
    %v77 = vld [vmem:[#allocation7] sm:$0xf]
    %v78 = vld [vmem:[#allocation7 + $0x4] sm:$0xf]
    %v79 = vld [vmem:[#allocation8] sm:$0xf]
    %v80 = vld [vmem:[#allocation8 + $0x4] sm:$0xf]
    %v81 = vld [vmem:[#allocation8 + $0x8] sm:$0xf]
    %v82 = vld [vmem:[#allocation8 + $0xc] sm:$0xf]
    %v87 = vunpack.c.l.b16 %v79
    %v88 = vunpack.c.l.b16 %v80
    %v89 = vunpack.c.l.b16 %v81
    %v90 = vunpack.c.l.b16 %v82
    %v91 = vpack.c.b16 %v88, %v87
    %v92 = vpack.c.b16 %v90, %v89
    %vm95 = vcmask 261120
    %v97 = vsel %vm95, %v76, 0
    %99 = vmatprep.subr.bf16.mxu0 0
    %100 = vmatpush1.bf16.msra.mxu0 %v91
    %101 = vmatprep.subr.bf16.mxu0 0
    %102 = vmatpush1.bf16.msra.mxu0 %v92
    %103 = vmatprep.subr.bf16.mxu0 0
    %104 = vmatpush1.bf16.msra.mxu0 0
    %105 = vmatprep.subr.bf16.mxu0 0
    %106 = vmatpush1.bf16.msra.mxu0 0
    %107 = vmatprep.subr.bf16.mxu0 0
    %108 = vmatpush1.bf16.msra.mxu0 0
    %109 = vmatprep.subr.bf16.mxu0 0
    %110 = vmatpush1.bf16.msra.mxu0 0
    %111 = vmatprep.subr.bf16.mxu0 0
    %112 = vmatpush1.bf16.msra.mxu0 0
    %113 = vmatprep.subr.bf16.mxu0 0
    %114 = vmatpush1.bf16.msra.mxu0 0
    %115 = vmatprep.subr.bf16.mxu0 0
    %116 = vmatpush1.bf16.msra.mxu0 0
    %117 = vmatprep.subr.bf16.mxu0 0
    %118 = vmatpush1.bf16.msra.mxu0 0
    %119 = vmatprep.subr.bf16.mxu0 0
    %120 = vmatpush1.bf16.msra.mxu0 0
    %121 = vmatprep.subr.bf16.mxu0 0
    %122 = vmatpush1.bf16.msra.mxu0 0
    %123 = vmatprep.subr.bf16.mxu0 0
    %124 = vmatpush1.bf16.msra.mxu0 0
    %125 = vmatprep.subr.bf16.mxu0 0
    %126 = vmatpush1.bf16.msra.mxu0 0
    %127 = vmatprep.subr.bf16.mxu0 0
    %128 = vmatpush1.bf16.msra.mxu0 0
    %129 = vmatprep.subr.bf16.mxu0 0
    %130 = vmatpush1.bf16.msra.mxu0 0
    %131 = vmatprep.mubr.bf16.mxu0 0
    %132 = vmatmul.mubr.bf16.gmra.mrb[0].mxu0 %v97
    %v133 = vpop.f32.mrb[0].mxu0
    %v134 = vadd.f32 0.0, %v133
    %v135 = vpop.f32.mrb[0].mxu0
    %v136 = vpop.f32.mrb[0].mxu0
    %v137 = vpop.f32.mrb[0].mxu0
    %138 = vdwg.mxu0
    %v141 = vunpack.c.l.b16 %v77
    %v142 = vunpack.c.l.b16 %v78
    %v143 = vpack.c.b16 %v142, %v141
    %vm145 = vcmask 130048
    %v147 = vsel %vm145, %v74, 0
    %149 = vmatprep.subr.bf16.mxu0 0
    %150 = vmatpush1.bf16.msra.mxu0 %v143
    %151 = vmatprep.subr.bf16.mxu0 0
    %152 = vmatpush1.bf16.msra.mxu0 0
    %153 = vmatprep.subr.bf16.mxu0 0
    %154 = vmatpush1.bf16.msra.mxu0 0
    %155 = vmatprep.subr.bf16.mxu0 0
    %156 = vmatpush1.bf16.msra.mxu0 0
    %157 = vmatprep.subr.bf16.mxu0 0
    %158 = vmatpush1.bf16.msra.mxu0 0
    %159 = vmatprep.subr.bf16.mxu0 0
    %160 = vmatpush1.bf16.msra.mxu0 0
    %161 = vmatprep.subr.bf16.mxu0 0
    %162 = vmatpush1.bf16.msra.mxu0 0
    %163 = vmatprep.subr.bf16.mxu0 0
    %164 = vmatpush1.bf16.msra.mxu0 0
    %165 = vmatprep.subr.bf16.mxu0 0
    %166 = vmatpush1.bf16.msra.mxu0 0
    %167 = vmatprep.subr.bf16.mxu0 0
    %168 = vmatpush1.bf16.msra.mxu0 0
    %169 = vmatprep.subr.bf16.mxu0 0
    %170 = vmatpush1.bf16.msra.mxu0 0
    %171 = vmatprep.subr.bf16.mxu0 0
    %172 = vmatpush1.bf16.msra.mxu0 0
    %173 = vmatprep.subr.bf16.mxu0 0
    %174 = vmatpush1.bf16.msra.mxu0 0
    %175 = vmatprep.subr.bf16.mxu0 0
    %176 = vmatpush1.bf16.msra.mxu0 0
    %177 = vmatprep.subr.bf16.mxu0 0
    %178 = vmatpush1.bf16.msra.mxu0 0
    %179 = vmatprep.subr.bf16.mxu0 0
    %180 = vmatpush1.bf16.msra.mxu0 0
    %181 = vmatprep.mubr.bf16.mxu0 0
    %182 = vmatmul.mubr.bf16.gmra.mrb[0].mxu0 %v147
    %v183 = vpop.f32.mrb[0].mxu0
    %v184 = vadd.f32 %v134, %v183
    %v185 = vpop.f32.mrb[0].mxu0
    %v186 = vpop.f32.mrb[0].mxu0
    %v187 = vpop.f32.mrb[0].mxu0
    %188 = vdwg.mxu0
    %v189 = vld [vmem:[%s4] sm:$0x1]
    %v191 = vlaneseq
    %v192 = vshrl.u32 %v191, 7
    %v193 = vsub.s32 0, %v192
    %v194 = vrot.slane %v189, %v193
    %v196 = vadd.f32 %v184, %v194
    %v197 = vlaneseq
    %v198 = vand.u32 %v197, 127
    %vm199 = vcmp.ge.s32.totalorder %v198, 32
    %vm200 = vcmp.lt.s32.totalorder %v198, 40
    %vm201 = vmand %vm199, %vm200
    %v202 = vsel %vm201, %v196, -inf
    %203 = vmax.xlane.f32.xlu0 %v202
    %v204 = vpop.xlane.xlu0 %203
    %v205 = vsub.f32 %v202, %v204
    %v206 = vmul.f32 %v205, 1.442695
    %v207 = vpow.pop %v206
    %208 = vadd.xlane.f32.xlu0 %v207
    %v209 = vpop.xlane.xlu0 %208
    %v210 = vlog2.pop %v209
    %v211 = vmul.f32 %v210, 0.6931472
    %v212 = vadd.f32 %v211, %v204
    %v213 = vsel %vm201, %v212, 0.0
    %v214 = vsub.f32 %v196, %v213
    %215 = vst [vmem:[#allocation10] sm:$0xff] %v214
    // Predicated region
    $region38: #{tpu_custom_call.1} parent=1 // pred_check
      _
    $region39: #{tpu_custom_call.1} parent=1 // pred_check_branch
      %217 = sbr.rel (0) target = $region41
    $region40: #{tpu_custom_call.1} parent=1 // pred_region
      %s219 = ssub.s32 128, 128
      %220 = vsyncadd [#allocation4], %s219
      %s222 = sshll.u32 [#allocation10], 4
      %s223 = int_to_ptr.vmem [resolvable:$true] %s222
      %225 = dma.vmem_to_hbm [thread:$0]  %s223, 128, %s5, [#allocation4]
    $region41: #{tpu_custom_call.1} parent=1 // pred_fallthru
      _
    // Predicated region
    $region42: #{tpu_custom_call.1} parent=1 // pred_check
      _
    $region43: #{tpu_custom_call.1} parent=1 // pred_check_branch
      %227 = sbr.rel (0) target = $region45
    $region44: #{tpu_custom_call.1} parent=1 // pred_region
      %228 = dma.done [#allocation4], 128
    $region45: #{tpu_custom_call.1} parent=1 // pred_fallthru
      _
    %229 = vsyncpa [#allocation3], 1
    %230 = vsyncpa [#allocation6], 1
    %231 = vsyncpa [#allocation9], 1
    %232 = vsyncpa [#allocation4], 1

</llo_original>
